<compile_context>
chip_gen: v7x
topology: tpu7x:2x2x1
jax: 0.10.0
libtpu: 0.0.40
codegen_flags: <defaults>
</compile_context>

<pallas_src>
import functools

import jax
import jax.numpy as jnp
from jax.experimental import pallas as pl
from jax.experimental.pallas import tpu as pltpu

_EPS = 1e-5
_HALO = 8   # leading/trailing pad rows: keeps the interior sublane-aligned


def _resblock_kernel(x_ref, wb1_ref, wb2_ref, dup_ref, g1_ref, b1_ref,
                     g2_ref, b2_ref, mask_ref, out_ref, hbuf_ref, *,
                     cout, inv_count):
    """Fused ResBlock on a row-flattened, lane-dense (rows, W*C) layout.

    x_ref    : (R+2*_HALO, W*Cin) f32; 8-aligned per-image row blocks
                                  (1 top pad + H real rows + pads), zeros elsewhere
    wb1_ref  : (3*W*Cin,  W*Cout) ky-folded banded conv1 weights (bf16 default)
    wb2_ref  : (3*W*Cout, W*Cout) ky-folded banded conv2 weights (bf16 default)
    dup_ref  : (W*Cin, W*Cout)    f32 0/1 residual duplication matrix (x -> cat(x,x))
    g*/b*    : (1, W*Cout)        f32 BN gamma / beta tiled by W
    mask_ref : (R, 1)             f32, 1 on real image rows, 0 on pad rows
    out_ref  : (R, W*Cout)        f32
    hbuf_ref : (R+2*_HALO, W*Cout) f32 scratch for the ReLU output + halo rows
    """
    R, WC = out_ref.shape
    cdt = wb1_ref.dtype                       # MXU operand dtype (bf16 by default)
    mask = mask_ref[...]                      # (R, 1) f32

    def folded_lhs(src_ref, base):
        # LHS row r = [src[r-1] | src[r] | src[r+1]]: the 3 ky taps folded into
        # the contraction dim -> one MXU push/pop per conv at full depth.
        return jnp.concatenate(
            [src_ref[base - 1:base - 1 + R, :].astype(cdt),
             src_ref[base:base + R, :].astype(cdt),
             src_ref[base + 1:base + 1 + R, :].astype(cdt)], axis=1)

    def channel_totals(row):
        # Sum the W lane-groups of a (1, W*Cout) row so every lane holds its
        # channel's total (exact f32; lane rotations are XLU work, VALU-free).
        w_count = WC // cout
        s = row
        if (w_count & (w_count - 1)) == 0:    # power-of-two W: log rotate tree
            shift = cout
            while shift < WC:
                s = s + pltpu.roll(s, shift, axis=1)
                shift *= 2
        else:
            for w in range(1, w_count):
                s = s + pltpu.roll(row, w * cout, axis=1)
        return s

    def batchnorm(acc, g_ref, b_ref):
        # Two-pass (mean-shifted) batch statistics: no E[x^2]-mean^2 cancellation.
        # Biased variance, eps=1e-5 (PyTorch training-mode BN); pad rows masked.
        mean = channel_totals(jnp.sum(acc * mask, axis=0, keepdims=True)) * inv_count
        cen = (acc - mean) * mask
        var = channel_totals(jnp.sum(cen * cen, axis=0, keepdims=True)) * inv_count
        scale = g_ref[...] * jax.lax.rsqrt(var + _EPS)
        return (acc - mean) * scale + b_ref[...]

    # ---- conv1 (single folded K=3*W*Cin matmul) -> BN1 -> ReLU --------------
    # (conv bias folded away: batch-statistic BN cancels it exactly.)
    acc1 = jnp.dot(folded_lhs(x_ref, _HALO), wb1_ref[...],
                   preferred_element_type=jnp.float32)
    h = jnp.maximum(batchnorm(acc1, g1_ref, b1_ref), 0.0) * mask   # f32 (R, WC)

    # Re-pad in H: zero only the 2 halo rows actually read; the interior store
    # starts at sublane offset 8 (aligned, unmasked vst).
    zero_row = jnp.zeros((1, WC), hbuf_ref.dtype)
    hbuf_ref[_HALO - 1:_HALO, :] = zero_row
    hbuf_ref[_HALO + R:_HALO + R + 1, :] = zero_row
    hbuf_ref[_HALO:_HALO + R, :] = h

    # ---- conv2 (single folded K=3*W*Cout matmul) -> BN2 ---------------------
    acc2 = jnp.dot(folded_lhs(hbuf_ref, _HALO), wb2_ref[...],
                   preferred_element_type=jnp.float32)
    y = batchnorm(acc2, g2_ref, b2_ref)

    # ---- residual (x or cat(x, x)) via one tiny exact K=W*Cin dup matmul ----
    resid = jnp.dot(x_ref[_HALO:_HALO + R, :], dup_ref[...],
                    preferred_element_type=jnp.float32)
    out_ref[...] = (y + resid).astype(out_ref.dtype)


def _band_conv_weights(w_hwio, width, dtype):
    """Fold the 3 kx taps and the width zero-padding of a 3x3 'same' conv into
    per-ky banded matrices of shape (3, width*Cin, width*Cout)."""
    cin, cout = w_hwio.shape[2], w_hwio.shape[3]
    xi = jnp.arange(width)[:, None]              # input pixel within the row
    xo = jnp.arange(width)[None, :]              # output pixel within the row
    kx = xi - xo + 1                             # kx tap linking them (pad=1)
    valid = (kx >= 0) & (kx <= 2)
    g = w_hwio[:, jnp.clip(kx, 0, 2)]            # (3, W, W, Cin, Cout)
    g = jnp.where(valid[None, :, :, None, None], g, 0.0)
    g = jnp.transpose(g, (0, 1, 3, 2, 4))        # (3, xi, Cin, xo, Cout)
    return g.reshape(3, width * cin, width * cout).astype(dtype)


def _dup_matrix(cin, cout, width):
    """0/1 block-diagonal matrix mapping a lane-dense x row to the residual row:
    per-pixel identity (cout==cin) or channel duplication (cout==2*cin)."""
    eye = jnp.eye(cin, dtype=jnp.float32)
    if cout == cin:
        blk = eye
    elif cout == 2 * cin:
        blk = jnp.concatenate([eye, eye], axis=1)        # torch.cat((x, x), dim=1)
    else:
        raise ValueError("ResBlock residual requires cout == cin or cout == 2*cin")
    return jnp.kron(jnp.eye(width, dtype=jnp.float32), blk)   # (W*Cin, W*Cout)


def resblock_forward(x_nchw, params, compute_dtype=jnp.bfloat16):
    (w1, cb1, g1, b1, w2, cb2, g2, b2) = params
    del cb1, cb2  # exactly cancelled by batch-statistic BatchNorm (see kernel doc)
    N, Cin, H, W = x_nchw.shape
    Cout = w1.shape[-1]
    WC = W * Cout

    # Per-image row block padded to a multiple of 8 sublanes
    # (1 top pad row + H real rows + bottom pads), plus an 8-row global halo on
    # both sides so the interior starts sublane-aligned.
    Hb = ((H + 2 + 7) // 8) * 8
    R = N * Hb

    x_rows = jnp.transpose(x_nchw, (0, 2, 3, 1)).reshape(N * H, W * Cin)
    row_idx = (_HALO + jnp.arange(N)[:, None] * Hb + 1
               + jnp.arange(H)[None, :]).reshape(-1)               # (N*H,)
    xbuf = jnp.zeros((R + 2 * _HALO, W * Cin), jnp.float32)
    xbuf = xbuf.at[row_idx].set(x_rows.astype(jnp.float32))        # single relayout pass
    mask = jnp.zeros((R, 1), jnp.float32).at[row_idx - _HALO].set(1.0)

    # ky-folded banded weights: (3, K, N) stacked along K in ky order.
    wb1 = _band_conv_weights(w1.astype(jnp.float32), W, compute_dtype)
    wb1 = wb1.reshape(3 * W * Cin, WC)
    wb2 = _band_conv_weights(w2.astype(jnp.float32), W, compute_dtype)
    wb2 = wb2.reshape(3 * WC, WC)
    dup = _dup_matrix(Cin, Cout, W)

    tile_w = lambda v: jnp.tile(v.astype(jnp.float32), W).reshape(1, WC)

    kernel = functools.partial(_resblock_kernel, cout=Cout,
                               inv_count=1.0 / float(N * H * W))
    vmem = pl.BlockSpec(memory_space=pltpu.MemorySpace.VMEM)
    args = (xbuf, wb1, wb2, dup,
            tile_w(g1), tile_w(b1), tile_w(g2), tile_w(b2), mask)

    out_flat = pl.pallas_call(
        kernel,
        out_shape=jax.ShapeDtypeStruct((R, WC), jnp.float32),
        in_specs=[vmem] * len(args),
        out_specs=vmem,
        scratch_shapes=[pltpu.VMEM((R + 2 * _HALO, WC), jnp.float32)],
    )(*args)

    out = out_flat[row_idx - _HALO].reshape(N, H, W, Cout)         # drop pad rows
    return jnp.transpose(out, (0, 3, 1, 2))                        # NHWC -> NCHW


def resblock_reference(x_nchw, params):
    """Pure-JAX reference (same math, lax.conv, conv biases kept) for checking."""
    (w1, cb1, g1, b1, w2, cb2, g2, b2) = params
    x = jnp.transpose(x_nchw, (0, 2, 3, 1))

    def conv(h, w, cb):
        y = jax.lax.conv_general_dilated(
            h, w, (1, 1), 'SAME', dimension_numbers=('NHWC', 'HWIO', 'NHWC'))
        return y + cb

    def bn(y, g, b):
        m = jnp.mean(y, axis=(0, 1, 2), keepdims=True)
        v = jnp.mean((y - m) ** 2, axis=(0, 1, 2), keepdims=True)
        return (y - m) * jax.lax.rsqrt(v + _EPS) * g + b

    h = jnp.maximum(bn(conv(x, w1, cb1), g1, b1), 0.0)
    y = bn(conv(h, w2, cb2), g2, b2)
    if y.shape != x.shape:
        y = y + jnp.concatenate([x, x], axis=-1)
    else:
        y = x + y
    return jnp.transpose(y, (0, 3, 1, 2))


if __name__ == "__main__":
    # input_size=4, output_size=8 so the mismatch branch (output + cat(x, x)) runs.
    N, Cin, H, W = 2, 4, 16, 16
    Cout = 8

    keys = jax.random.split(jax.random.PRNGKey(0), 9)
    x_nchw = jax.random.normal(keys[0], (N, Cin, H, W), jnp.float32)

    w1 = jax.random.normal(keys[1], (3, 3, Cin, Cout), jnp.float32) * 0.2   # HWIO
    cb1 = jax.random.normal(keys[2], (Cout,), jnp.float32) * 0.1            # conv1 bias
    g1 = jax.random.uniform(keys[3], (Cout,), jnp.float32, 0.5, 1.5)        # BN1 gamma
    b1 = jax.random.normal(keys[4], (Cout,), jnp.float32) * 0.1             # BN1 beta
    w2 = jax.random.normal(keys[5], (3, 3, Cout, Cout), jnp.float32) * 0.2  # HWIO
    cb2 = jax.random.normal(keys[6], (Cout,), jnp.float32) * 0.1            # conv2 bias
    g2 = jax.random.uniform(keys[7], (Cout,), jnp.float32, 0.5, 1.5)        # BN2 gamma
    b2 = jax.random.normal(keys[8], (Cout,), jnp.float32) * 0.1             # BN2 beta
    params = (w1, cb1, g1, b1, w2, cb2, g2, b2)

    ref = jax.block_until_ready(resblock_reference(x_nchw, params))

    # Default path: bf16 MXU operands (native fast path on v5e/v6e/v7x).
    out_bf16 = jax.block_until_ready(resblock_forward(x_nchw, params))
    # f32 operand path: tight check of the kernel's layout / BN math.
    out_f32 = jax.block_until_ready(
        resblock_forward(x_nchw, params, compute_dtype=jnp.float32))

    err_f32 = float(jnp.max(jnp.abs(out_f32 - ref)))
    err_bf16 = float(jnp.max(jnp.abs(out_bf16 - ref)))
    mean_bf16 = float(jnp.mean(jnp.abs(out_bf16 - ref)))

    ok = (out_bf16.shape == (N, Cout, H, W)
          and out_f32.shape == (N, Cout, H, W)
          and err_f32 < 2e-2          # exact-math (f32 operand) path
          and err_bf16 < 1e-1         # bf16 operand rounding through 2 convs + 2 BNs
          and mean_bf16 < 3e-2)
    if not ok:
        raise AssertionError(
            f"mismatch: f32_max={err_f32}, bf16_max={err_bf16}, bf16_mean={mean_bf16}")
    print("KERNEL_OK")
</pallas_src>

<mosaic_0001>
module attributes {stable_mosaic.version = 11 : i64} {
  func.func @_resblock_kernel(%arg0: memref<64x64xf32, #tpu.memory_space<vmem>>, %arg1: memref<192x128xbf16, #tpu.memory_space<vmem>>, %arg2: memref<384x128xbf16, #tpu.memory_space<vmem>>, %arg3: memref<64x128xf32, #tpu.memory_space<vmem>>, %arg4: memref<1x128xf32, #tpu.memory_space<vmem>>, %arg5: memref<1x128xf32, #tpu.memory_space<vmem>>, %arg6: memref<1x128xf32, #tpu.memory_space<vmem>>, %arg7: memref<1x128xf32, #tpu.memory_space<vmem>>, %arg8: memref<48x1xf32, #tpu.memory_space<vmem>>, %arg9: memref<48x128xf32, #tpu.memory_space<vmem>>, %arg10: memref<64x128xf32, #tpu.memory_space<vmem>>) attributes {dimension_semantics = [], scalar_prefetch = 0 : i64, scratch_operands = 1 : i64, tpu.core_type = #tpu.core_type<tc>} {
    %c0 = arith.constant 0 : index
    %c0_0 = arith.constant 0 : index
    %0 = vector.load %arg8[%c0, %c0_0] : memref<48x1xf32, #tpu.memory_space<vmem>>, vector<48x1xf32>
    %c7 = arith.constant 7 : index
    %c0_1 = arith.constant 0 : index
    %1 = vector.load %arg0[%c7, %c0_1] : memref<64x64xf32, #tpu.memory_space<vmem>>, vector<48x64xf32>
    %2 = arith.truncf %1 : vector<48x64xf32> to vector<48x64xbf16>
    %c8 = arith.constant 8 : index
    %c0_2 = arith.constant 0 : index
    %3 = vector.load %arg0[%c8, %c0_2] : memref<64x64xf32, #tpu.memory_space<vmem>>, vector<48x64xf32>
    %4 = arith.truncf %3 : vector<48x64xf32> to vector<48x64xbf16>
    %c9 = arith.constant 9 : index
    %c0_3 = arith.constant 0 : index
    %5 = vector.load %arg0[%c9, %c0_3] : memref<64x64xf32, #tpu.memory_space<vmem>>, vector<48x64xf32>
    %6 = arith.truncf %5 : vector<48x64xf32> to vector<48x64xbf16>
    %7 = tpu.concatenate %2, %4, %6 in 1 : vector<48x64xbf16>, vector<48x64xbf16>, vector<48x64xbf16> -> vector<48x192xbf16>
    %c0_4 = arith.constant 0 : index
    %c0_5 = arith.constant 0 : index
    %8 = vector.load %arg1[%c0_4, %c0_5] : memref<192x128xbf16, #tpu.memory_space<vmem>>, vector<192x128xbf16>
    %cst = arith.constant dense<0.000000e+00> : vector<48x128xf32>
    %9 = tpu.matmul %7, %8, %cst {dimension_numbers = #tpu.dot_dimension_numbers<[1], [0], [0], [1], [0, 0, 1, 1], [], []>} : vector<48x192xbf16>, vector<192x128xbf16>, vector<48x128xf32> -> vector<48x128xf32>
    %10 = vector.broadcast %0 : vector<48x1xf32> to vector<48x128xf32>
    %11 = arith.mulf %9, %10 : vector<48x128xf32>
    %cst_6 = arith.constant dense<0.000000e+00> : vector<128xf32>
    %12 = vector.multi_reduction <add>, %11, %cst_6 [0] : vector<48x128xf32> to vector<128xf32>
    %13 = vector.shape_cast %12 : vector<128xf32> to vector<1x128xf32>
    %c8_i32 = arith.constant 8 : i32
    %14 = tpu.dynamic_rotate %13 by %c8_i32 dim 1 : vector<1x128xf32>, i32 -> vector<1x128xf32>
    %15 = arith.addf %13, %14 : vector<1x128xf32>
    %c16_i32 = arith.constant 16 : i32
    %16 = tpu.dynamic_rotate %15 by %c16_i32 dim 1 : vector<1x128xf32>, i32 -> vector<1x128xf32>
    %17 = arith.addf %15, %16 : vector<1x128xf32>
    %c32_i32 = arith.constant 32 : i32
    %18 = tpu.dynamic_rotate %17 by %c32_i32 dim 1 : vector<1x128xf32>, i32 -> vector<1x128xf32>
    %19 = arith.addf %17, %18 : vector<1x128xf32>
    %c64_i32 = arith.constant 64 : i32
    %20 = tpu.dynamic_rotate %19 by %c64_i32 dim 1 : vector<1x128xf32>, i32 -> vector<1x128xf32>
    %21 = arith.addf %19, %20 : vector<1x128xf32>
    %cst_7 = arith.constant 0.001953125 : f32
    %22 = vector.broadcast %cst_7 : f32 to vector<1x128xf32>
    %23 = arith.mulf %21, %22 : vector<1x128xf32>
    %24 = vector.broadcast %23 : vector<1x128xf32> to vector<48x128xf32>
    %25 = arith.subf %9, %24 : vector<48x128xf32>
    %26 = vector.broadcast %0 : vector<48x1xf32> to vector<48x128xf32>
    %27 = arith.mulf %25, %26 : vector<48x128xf32>
    %28 = arith.mulf %27, %27 : vector<48x128xf32>
    %cst_8 = arith.constant dense<0.000000e+00> : vector<128xf32>
    %29 = vector.multi_reduction <add>, %28, %cst_8 [0] : vector<48x128xf32> to vector<128xf32>
    %30 = vector.shape_cast %29 : vector<128xf32> to vector<1x128xf32>
    %c8_i32_9 = arith.constant 8 : i32
    %31 = tpu.dynamic_rotate %30 by %c8_i32_9 dim 1 : vector<1x128xf32>, i32 -> vector<1x128xf32>
    %32 = arith.addf %30, %31 : vector<1x128xf32>
    %c16_i32_10 = arith.constant 16 : i32
    %33 = tpu.dynamic_rotate %32 by %c16_i32_10 dim 1 : vector<1x128xf32>, i32 -> vector<1x128xf32>
    %34 = arith.addf %32, %33 : vector<1x128xf32>
    %c32_i32_11 = arith.constant 32 : i32
    %35 = tpu.dynamic_rotate %34 by %c32_i32_11 dim 1 : vector<1x128xf32>, i32 -> vector<1x128xf32>
    %36 = arith.addf %34, %35 : vector<1x128xf32>
    %c64_i32_12 = arith.constant 64 : i32
    %37 = tpu.dynamic_rotate %36 by %c64_i32_12 dim 1 : vector<1x128xf32>, i32 -> vector<1x128xf32>
    %38 = arith.addf %36, %37 : vector<1x128xf32>
    %cst_13 = arith.constant 0.001953125 : f32
    %39 = vector.broadcast %cst_13 : f32 to vector<1x128xf32>
    %40 = arith.mulf %38, %39 : vector<1x128xf32>
    %c0_14 = arith.constant 0 : index
    %c0_15 = arith.constant 0 : index
    %41 = vector.load %arg4[%c0_14, %c0_15] : memref<1x128xf32, #tpu.memory_space<vmem>>, vector<1x128xf32>
    %cst_16 = arith.constant 9.99999974E-6 : f32
    %42 = vector.broadcast %cst_16 : f32 to vector<1x128xf32>
    %43 = arith.addf %40, %42 : vector<1x128xf32>
    %44 = math.rsqrt %43 : vector<1x128xf32>
    %45 = arith.mulf %41, %44 : vector<1x128xf32>
    %46 = vector.broadcast %23 : vector<1x128xf32> to vector<48x128xf32>
    %47 = arith.subf %9, %46 : vector<48x128xf32>
    %48 = vector.broadcast %45 : vector<1x128xf32> to vector<48x128xf32>
    %49 = arith.mulf %47, %48 : vector<48x128xf32>
    %c0_17 = arith.constant 0 : index
    %c0_18 = arith.constant 0 : index
    %50 = vector.load %arg5[%c0_17, %c0_18] : memref<1x128xf32, #tpu.memory_space<vmem>>, vector<1x128xf32>
    %51 = vector.broadcast %50 : vector<1x128xf32> to vector<48x128xf32>
    %52 = arith.addf %49, %51 : vector<48x128xf32>
    %cst_19 = arith.constant 0.000000e+00 : f32
    %53 = vector.broadcast %cst_19 : f32 to vector<48x128xf32>
    %54 = arith.maximumf %52, %53 : vector<48x128xf32>
    %55 = vector.broadcast %0 : vector<48x1xf32> to vector<48x128xf32>
    %56 = arith.mulf %54, %55 : vector<48x128xf32>
    %cst_20 = arith.constant 0.000000e+00 : f32
    %57 = vector.broadcast %cst_20 : f32 to vector<1x128xf32>
    %c7_21 = arith.constant 7 : index
    %c0_22 = arith.constant 0 : index
    %58 = vector.load %arg10[%c7_21, %c0_22] : memref<64x128xf32, #tpu.memory_space<vmem>>, vector<1x128xf32>
    tpu.vector_store %arg10[%c7_21, %c0_22], %57 {strides = array<i32>} : memref<64x128xf32, #tpu.memory_space<vmem>>, vector<1x128xf32>,
    %c56 = arith.constant 56 : index
    %c0_23 = arith.constant 0 : index
    %59 = vector.load %arg10[%c56, %c0_23] : memref<64x128xf32, #tpu.memory_space<vmem>>, vector<1x128xf32>
    tpu.vector_store %arg10[%c56, %c0_23], %57 {strides = array<i32>} : memref<64x128xf32, #tpu.memory_space<vmem>>, vector<1x128xf32>,
    %c8_24 = arith.constant 8 : index
    %c0_25 = arith.constant 0 : index
    %60 = vector.load %arg10[%c8_24, %c0_25] : memref<64x128xf32, #tpu.memory_space<vmem>>, vector<48x128xf32>
    tpu.vector_store %arg10[%c8_24, %c0_25], %56 {strides = array<i32>} : memref<64x128xf32, #tpu.memory_space<vmem>>, vector<48x128xf32>,
    %c7_26 = arith.constant 7 : index
    %c0_27 = arith.constant 0 : index
    %61 = vector.load %arg10[%c7_26, %c0_27] : memref<64x128xf32, #tpu.memory_space<vmem>>, vector<48x128xf32>
    %62 = arith.truncf %61 : vector<48x128xf32> to vector<48x128xbf16>
    %c8_28 = arith.constant 8 : index
    %c0_29 = arith.constant 0 : index
    %63 = vector.load %arg10[%c8_28, %c0_29] : memref<64x128xf32, #tpu.memory_space<vmem>>, vector<48x128xf32>
    %64 = arith.truncf %63 : vector<48x128xf32> to vector<48x128xbf16>
    %c9_30 = arith.constant 9 : index
    %c0_31 = arith.constant 0 : index
    %65 = vector.load %arg10[%c9_30, %c0_31] : memref<64x128xf32, #tpu.memory_space<vmem>>, vector<48x128xf32>
    %66 = arith.truncf %65 : vector<48x128xf32> to vector<48x128xbf16>
    %67 = tpu.concatenate %62, %64, %66 in 1 : vector<48x128xbf16>, vector<48x128xbf16>, vector<48x128xbf16> -> vector<48x384xbf16>
    %c0_32 = arith.constant 0 : index
    %c0_33 = arith.constant 0 : index
    %68 = vector.load %arg2[%c0_32, %c0_33] : memref<384x128xbf16, #tpu.memory_space<vmem>>, vector<384x128xbf16>
    %cst_34 = arith.constant dense<0.000000e+00> : vector<48x128xf32>
    %69 = tpu.matmul %67, %68, %cst_34 {dimension_numbers = #tpu.dot_dimension_numbers<[1], [0], [0], [1], [0, 0, 1, 1], [], []>} : vector<48x384xbf16>, vector<384x128xbf16>, vector<48x128xf32> -> vector<48x128xf32>
    %70 = vector.broadcast %0 : vector<48x1xf32> to vector<48x128xf32>
    %71 = arith.mulf %69, %70 : vector<48x128xf32>
    %cst_35 = arith.constant dense<0.000000e+00> : vector<128xf32>
    %72 = vector.multi_reduction <add>, %71, %cst_35 [0] : vector<48x128xf32> to vector<128xf32>
    %73 = vector.shape_cast %72 : vector<128xf32> to vector<1x128xf32>
    %c8_i32_36 = arith.constant 8 : i32
    %74 = tpu.dynamic_rotate %73 by %c8_i32_36 dim 1 : vector<1x128xf32>, i32 -> vector<1x128xf32>
    %75 = arith.addf %73, %74 : vector<1x128xf32>
    %c16_i32_37 = arith.constant 16 : i32
    %76 = tpu.dynamic_rotate %75 by %c16_i32_37 dim 1 : vector<1x128xf32>, i32 -> vector<1x128xf32>
    %77 = arith.addf %75, %76 : vector<1x128xf32>
    %c32_i32_38 = arith.constant 32 : i32
    %78 = tpu.dynamic_rotate %77 by %c32_i32_38 dim 1 : vector<1x128xf32>, i32 -> vector<1x128xf32>
    %79 = arith.addf %77, %78 : vector<1x128xf32>
    %c64_i32_39 = arith.constant 64 : i32
    %80 = tpu.dynamic_rotate %79 by %c64_i32_39 dim 1 : vector<1x128xf32>, i32 -> vector<1x128xf32>
    %81 = arith.addf %79, %80 : vector<1x128xf32>
    %cst_40 = arith.constant 0.001953125 : f32
    %82 = vector.broadcast %cst_40 : f32 to vector<1x128xf32>
    %83 = arith.mulf %81, %82 : vector<1x128xf32>
    %84 = vector.broadcast %83 : vector<1x128xf32> to vector<48x128xf32>
    %85 = arith.subf %69, %84 : vector<48x128xf32>
    %86 = vector.broadcast %0 : vector<48x1xf32> to vector<48x128xf32>
    %87 = arith.mulf %85, %86 : vector<48x128xf32>
    %88 = arith.mulf %87, %87 : vector<48x128xf32>
    %cst_41 = arith.constant dense<0.000000e+00> : vector<128xf32>
    %89 = vector.multi_reduction <add>, %88, %cst_41 [0] : vector<48x128xf32> to vector<128xf32>
    %90 = vector.shape_cast %89 : vector<128xf32> to vector<1x128xf32>
    %c8_i32_42 = arith.constant 8 : i32
    %91 = tpu.dynamic_rotate %90 by %c8_i32_42 dim 1 : vector<1x128xf32>, i32 -> vector<1x128xf32>
    %92 = arith.addf %90, %91 : vector<1x128xf32>
    %c16_i32_43 = arith.constant 16 : i32
    %93 = tpu.dynamic_rotate %92 by %c16_i32_43 dim 1 : vector<1x128xf32>, i32 -> vector<1x128xf32>
    %94 = arith.addf %92, %93 : vector<1x128xf32>
    %c32_i32_44 = arith.constant 32 : i32
    %95 = tpu.dynamic_rotate %94 by %c32_i32_44 dim 1 : vector<1x128xf32>, i32 -> vector<1x128xf32>
    %96 = arith.addf %94, %95 : vector<1x128xf32>
    %c64_i32_45 = arith.constant 64 : i32
    %97 = tpu.dynamic_rotate %96 by %c64_i32_45 dim 1 : vector<1x128xf32>, i32 -> vector<1x128xf32>
    %98 = arith.addf %96, %97 : vector<1x128xf32>
    %cst_46 = arith.constant 0.001953125 : f32
    %99 = vector.broadcast %cst_46 : f32 to vector<1x128xf32>
    %100 = arith.mulf %98, %99 : vector<1x128xf32>
    %c0_47 = arith.constant 0 : index
    %c0_48 = arith.constant 0 : index
    %101 = vector.load %arg6[%c0_47, %c0_48] : memref<1x128xf32, #tpu.memory_space<vmem>>, vector<1x128xf32>
    %cst_49 = arith.constant 9.99999974E-6 : f32
    %102 = vector.broadcast %cst_49 : f32 to vector<1x128xf32>
    %103 = arith.addf %100, %102 : vector<1x128xf32>
    %104 = math.rsqrt %103 : vector<1x128xf32>
    %105 = arith.mulf %101, %104 : vector<1x128xf32>
    %106 = vector.broadcast %83 : vector<1x128xf32> to vector<48x128xf32>
    %107 = arith.subf %69, %106 : vector<48x128xf32>
    %108 = vector.broadcast %105 : vector<1x128xf32> to vector<48x128xf32>
    %109 = arith.mulf %107, %108 : vector<48x128xf32>
    %c0_50 = arith.constant 0 : index
    %c0_51 = arith.constant 0 : index
    %110 = vector.load %arg7[%c0_50, %c0_51] : memref<1x128xf32, #tpu.memory_space<vmem>>, vector<1x128xf32>
    %111 = vector.broadcast %110 : vector<1x128xf32> to vector<48x128xf32>
    %112 = arith.addf %109, %111 : vector<48x128xf32>
    %c8_52 = arith.constant 8 : index
    %c0_53 = arith.constant 0 : index
    %113 = vector.load %arg0[%c8_52, %c0_53] : memref<64x64xf32, #tpu.memory_space<vmem>>, vector<48x64xf32>
    %c0_54 = arith.constant 0 : index
    %c0_55 = arith.constant 0 : index
    %114 = vector.load %arg3[%c0_54, %c0_55] : memref<64x128xf32, #tpu.memory_space<vmem>>, vector<64x128xf32>
    %cst_56 = arith.constant dense<0.000000e+00> : vector<48x128xf32>
    %115 = tpu.matmul %113, %114, %cst_56 {dimension_numbers = #tpu.dot_dimension_numbers<[1], [0], [0], [1], [0, 0, 1, 1], [], []>} : vector<48x64xf32>, vector<64x128xf32>, vector<48x128xf32> -> vector<48x128xf32>
    %116 = arith.addf %112, %115 : vector<48x128xf32>
    %c0_57 = arith.constant 0 : index
    %c0_58 = arith.constant 0 : index
    %117 = vector.load %arg9[%c0_57, %c0_58] : memref<48x128xf32, #tpu.memory_space<vmem>>, vector<48x128xf32>
    tpu.vector_store %arg9[%c0_57, %c0_58], %116 {strides = array<i32>} : memref<48x128xf32, #tpu.memory_space<vmem>>, vector<48x128xf32>,
    return
  }
}

</mosaic_0001>

<llo_original>
// kernel: tpu_custom_call.1
$region0: #{tpu_custom_call.1}
  #allocation0 [shape = 'u32[]', space=smem, size = 0x4, offset = 0x4, fixed_abs, tag = 'smem constant byte address 0x4 - core index']
  #allocation1 [shape = 'u32[144,128]{1,0:T(1,128)}', space=vmem, size = 0x12000, scoped, tag = 'internal scratch']
  #allocation2 [shape = 'f32[64,128]{1,0:T(8,128)}', space=vmem, size = 0x8000, scoped, tag = 'scratch operand']
  %s0 = inlined_call_operand.hbm [shape: f32[64,64], index: 0, kind: input, shape index: {}]
  %s1 = inlined_call_operand.hbm [shape: bf16[192,128], index: 1, kind: input, shape index: {}]
  %s2 = inlined_call_operand.hbm [shape: bf16[384,128], index: 2, kind: input, shape index: {}]
  %s3 = inlined_call_operand.hbm [shape: f32[64,128], index: 3, kind: input, shape index: {}]
  %s4 = inlined_call_operand.vmem [shape: f32[1,128], index: 4, kind: input, shape index: {}]
  %s5 = inlined_call_operand.vmem [shape: f32[1,128], index: 5, kind: input, shape index: {}]
  %s6 = inlined_call_operand.vmem [shape: f32[1,128], index: 6, kind: input, shape index: {}]
  %s7 = inlined_call_operand.vmem [shape: f32[1,128], index: 7, kind: input, shape index: {}]
  %s8 = inlined_call_operand.vmem [shape: f32[48,1], index: 8, kind: input, shape index: {}]
  %s9 = inlined_call_operand.hbm [shape: f32[48,128], index: 9, kind: output, shape index: {}]
  %s10 = sld [smem:[#allocation0]]
  $region62: #{tpu_custom_call.1} parent=0
    _
  %s12 = ssub.s32 1, %s10
  %s13 = scalar_select 0, %s12, %s10
  $region1: #{tpu_custom_call.1} parent=0
    #allocation3 [shape = 'u8[32768]{0}', space=vmem, size = 0x8000, scoped, tag = 'input window, operand 0, single buffered']
    #allocation4 [shape = 's32[1]{0}', space=sflag, size = 0x4, scoped, tag = 'scoped memory for tpu_custom_call.1']
    #allocation5 [shape = 's32[1]{0}', space=sflag, size = 0x4, scoped, tag = 'scoped memory for tpu_custom_call.1']
    #allocation6 [shape = 'u8[49152]{0}', space=vmem, size = 0xc000, scoped, tag = 'input window, operand 1, single buffered']
    #allocation7 [shape = 's32[1]{0}', space=sflag, size = 0x4, scoped, tag = 'scoped memory for tpu_custom_call.1']
    #allocation8 [shape = 'u8[98304]{0}', space=vmem, size = 0x18000, scoped, tag = 'input window, operand 2, single buffered']
    #allocation9 [shape = 'u8[32768]{0}', space=vmem, size = 0x8000, scoped, tag = 'input window, operand 3, single buffered']
    #allocation10 [shape = 's32[1]{0}', space=sflag, size = 0x4, scoped, tag = 'scoped memory for tpu_custom_call.1']
    #allocation11 [shape = 'u8[24576]{0}', space=vmem, size = 0x6000, scoped, tag = 'output window, operand 0, single buffered']
    %14 = vsyncpa [#allocation4], 0
    %15 = vsyncpa [#allocation7], 0
    %16 = vsyncpa [#allocation10], 0
    %17 = vsyncpa [#allocation5], 0
    // Predicated region
    $region2: #{tpu_custom_call.1} parent=1 // pred_check
      _
    $region3: #{tpu_custom_call.1} parent=1 // pred_check_branch
      %19 = sbr.rel (0) target = $region5
    $region4: #{tpu_custom_call.1} parent=1 // pred_region
      %s21 = ssub.s32 1024, 1024
      %22 = vsyncadd [#allocation4], %s21
      %s23 = sshll.u32 [#allocation3], 4
      %s24 = int_to_ptr.vmem [resolvable:$true] %s23
      %29 = dma.hbm_to_vmem [thread:$0]  %s0, 1024, %s24, [#allocation4], 128, 128, 8
    $region5: #{tpu_custom_call.1} parent=1 // pred_fallthru
      _
    // Predicated region
    $region6: #{tpu_custom_call.1} parent=1 // pred_check
      _
    $region7: #{tpu_custom_call.1} parent=1 // pred_check_branch
      %31 = sbr.rel (0) target = $region9
    $region8: #{tpu_custom_call.1} parent=1 // pred_region
      %s33 = ssub.s32 1536, 1536
      %34 = vsyncadd [#allocation7], %s33
      %s35 = sshll.u32 [#allocation6], 4
      %s36 = int_to_ptr.vmem [resolvable:$true] %s35
      %41 = dma.hbm_to_vmem [thread:$0]  %s1, 1536, %s36, [#allocation7], 64, 64, 4
    $region9: #{tpu_custom_call.1} parent=1 // pred_fallthru
      _
    // Predicated region
    $region10: #{tpu_custom_call.1} parent=1 // pred_check
      _
    $region11: #{tpu_custom_call.1} parent=1 // pred_check_branch
      %43 = sbr.rel (0) target = $region13
    $region12: #{tpu_custom_call.1} parent=1 // pred_region
      %s45 = ssub.s32 3072, 3072
      %46 = vsyncadd [#allocation7], %s45
      %s47 = sshll.u32 [#allocation8], 4
      %s48 = int_to_ptr.vmem [resolvable:$true] %s47
      %53 = dma.hbm_to_vmem [thread:$0]  %s2, 3072, %s48, [#allocation7], 64, 64, 4
    $region13: #{tpu_custom_call.1} parent=1 // pred_fallthru
      _
    // Predicated region
    $region14: #{tpu_custom_call.1} parent=1 // pred_check
      _
    $region15: #{tpu_custom_call.1} parent=1 // pred_check_branch
      %55 = sbr.rel (0) target = $region17
    $region16: #{tpu_custom_call.1} parent=1 // pred_region
      %s57 = ssub.s32 1024, 1024
      %58 = vsyncadd [#allocation10], %s57
      %s59 = sshll.u32 [#allocation9], 4
      %s60 = int_to_ptr.vmem [resolvable:$true] %s59
      %65 = dma.hbm_to_vmem [thread:$0]  %s3, 1024, %s60, [#allocation10], 128, 128, 8
    $region17: #{tpu_custom_call.1} parent=1 // pred_fallthru
      _
    // Predicated region
    $region18: #{tpu_custom_call.1} parent=1 // pred_check
      _
    $region19: #{tpu_custom_call.1} parent=1 // pred_check_branch
      %67 = sbr.rel (0) target = $region21
    $region20: #{tpu_custom_call.1} parent=1 // pred_region
      _
    $region21: #{tpu_custom_call.1} parent=1 // pred_fallthru
      _
    // Predicated region
    $region22: #{tpu_custom_call.1} parent=1 // pred_check
      _
    $region23: #{tpu_custom_call.1} parent=1 // pred_check_branch
      %69 = sbr.rel (0) target = $region25
    $region24: #{tpu_custom_call.1} parent=1 // pred_region
      _
    $region25: #{tpu_custom_call.1} parent=1 // pred_fallthru
      _
    // Predicated region
    $region26: #{tpu_custom_call.1} parent=1 // pred_check
      _
    $region27: #{tpu_custom_call.1} parent=1 // pred_check_branch
      %71 = sbr.rel (0) target = $region29
    $region28: #{tpu_custom_call.1} parent=1 // pred_region
      _
    $region29: #{tpu_custom_call.1} parent=1 // pred_fallthru
      _
    // Predicated region
    $region30: #{tpu_custom_call.1} parent=1 // pred_check
      _
    $region31: #{tpu_custom_call.1} parent=1 // pred_check_branch
      %73 = sbr.rel (0) target = $region33
    $region32: #{tpu_custom_call.1} parent=1 // pred_region
      _
    $region33: #{tpu_custom_call.1} parent=1 // pred_fallthru
      _
    // Predicated region
    $region34: #{tpu_custom_call.1} parent=1 // pred_check
      _
    $region35: #{tpu_custom_call.1} parent=1 // pred_check_branch
      %75 = sbr.rel (0) target = $region37
    $region36: #{tpu_custom_call.1} parent=1 // pred_region
      _
    $region37: #{tpu_custom_call.1} parent=1 // pred_fallthru
      _
    // Predicated region
    $region38: #{tpu_custom_call.1} parent=1 // pred_check
      _
    $region39: #{tpu_custom_call.1} parent=1 // pred_check_branch
      %77 = sbr.rel (0) target = $region41
    $region40: #{tpu_custom_call.1} parent=1 // pred_region
      %78 = dma.done [#allocation4], 1024
    $region41: #{tpu_custom_call.1} parent=1 // pred_fallthru
      _
    // Predicated region
    $region42: #{tpu_custom_call.1} parent=1 // pred_check
      _
    $region43: #{tpu_custom_call.1} parent=1 // pred_check_branch
      %80 = sbr.rel (0) target = $region45
    $region44: #{tpu_custom_call.1} parent=1 // pred_region
      %81 = dma.done [#allocation7], 1536
    $region45: #{tpu_custom_call.1} parent=1 // pred_fallthru
      _
    // Predicated region
    $region46: #{tpu_custom_call.1} parent=1 // pred_check
      _
    $region47: #{tpu_custom_call.1} parent=1 // pred_check_branch
      %83 = sbr.rel (0) target = $region49
    $region48: #{tpu_custom_call.1} parent=1 // pred_region
      %84 = dma.done [#allocation7], 3072
    $region49: #{tpu_custom_call.1} parent=1 // pred_fallthru
      _
    // Predicated region
    $region50: #{tpu_custom_call.1} parent=1 // pred_check
      _
    $region51: #{tpu_custom_call.1} parent=1 // pred_check_branch
      %86 = sbr.rel (0) target = $region53
    $region52: #{tpu_custom_call.1} parent=1 // pred_region
      %87 = dma.done [#allocation10], 1024
    $region53: #{tpu_custom_call.1} parent=1 // pred_fallthru
      _
    %v89 = vld [vmem:[%s8] sm:$0xff]
    %v90 = vld [vmem:[%s8 + $0x8] sm:$0xff]
    %v91 = vld [vmem:[%s8 + $0x10] sm:$0xff]
    %v92 = vld [vmem:[%s8 + $0x18] sm:$0xff]
    %v93 = vld [vmem:[%s8 + $0x20] sm:$0xff]
    %v94 = vld [vmem:[%s8 + $0x28] sm:$0xff]
    %v95 = vld [vmem:[#allocation3 + $0x7] sm:$0xff]
    %v96 = vld [vmem:[#allocation3 + $0xf] sm:$0xff]
    %v97 = vld [vmem:[#allocation3 + $0x17] sm:$0xff]
    %v98 = vld [vmem:[#allocation3 + $0x1f] sm:$0xff]
    %v99 = vld [vmem:[#allocation3 + $0x27] sm:$0xff]
    %v100 = vld [vmem:[#allocation3 + $0x2f] sm:$0xff]
    %v101 = vpack.c.bf16 %v96, %v95
    %v102 = vpack.c.bf16 %v98, %v97
    %v103 = vpack.c.bf16 %v100, %v99
    %v104 = vld [vmem:[#allocation3 + $0x8] sm:$0xff]
    %v105 = vld [vmem:[#allocation3 + $0x10] sm:$0xff]
    %v106 = vld [vmem:[#allocation3 + $0x18] sm:$0xff]
    %v107 = vld [vmem:[#allocation3 + $0x20] sm:$0xff]
    %v108 = vld [vmem:[#allocation3 + $0x28] sm:$0xff]
    %v109 = vld [vmem:[#allocation3 + $0x30] sm:$0xff]
    %v110 = vpack.c.bf16 %v105, %v104
    %v111 = vpack.c.bf16 %v107, %v106
    %v112 = vpack.c.bf16 %v109, %v108
    %v113 = vld [vmem:[#allocation3 + $0x9] sm:$0xff]
    %v114 = vld [vmem:[#allocation3 + $0x11] sm:$0xff]
    %v115 = vld [vmem:[#allocation3 + $0x19] sm:$0xff]
    %v116 = vld [vmem:[#allocation3 + $0x21] sm:$0xff]
    %v117 = vld [vmem:[#allocation3 + $0x29] sm:$0xff]
    %v118 = vld [vmem:[#allocation3 + $0x31] sm:$0xff]
    %v119 = vpack.c.bf16 %v114, %v113
    %v120 = vpack.c.bf16 %v116, %v115
    %v121 = vpack.c.bf16 %v118, %v117
    %125 = vrot.lane.b32.xlu0 %v110, 64
    %v126 = vpop.permute.xlu0 %125
    %127 = vrot.lane.b32.xlu0 %v111, 64
    %v128 = vpop.permute.xlu0 %127
    %129 = vrot.lane.b32.xlu0 %v112, 64
    %v130 = vpop.permute.xlu0 %129
    %vm131 = vcmask 523264
    %v134 = vsel %vm131, %v101, %v126
    %v138 = vsel %vm131, %v102, %v128
    %v142 = vsel %vm131, %v103, %v130
    %v144 = vld [vmem:[#allocation6] sm:$0xf]
    %v145 = vld [vmem:[#allocation6 + $0x4] sm:$0xf]
    %v146 = vld [vmem:[#allocation6 + $0x8] sm:$0xf]
    %v147 = vld [vmem:[#allocation6 + $0xc] sm:$0xf]
    %v148 = vld [vmem:[#allocation6 + $0x10] sm:$0xf]
    %v149 = vld [vmem:[#allocation6 + $0x14] sm:$0xf]
    %v150 = vld [vmem:[#allocation6 + $0x18] sm:$0xf]
    %v151 = vld [vmem:[#allocation6 + $0x1c] sm:$0xf]
    %v152 = vld [vmem:[#allocation6 + $0x20] sm:$0xf]
    %v153 = vld [vmem:[#allocation6 + $0x24] sm:$0xf]
    %v154 = vld [vmem:[#allocation6 + $0x28] sm:$0xf]
    %v155 = vld [vmem:[#allocation6 + $0x2c] sm:$0xf]
    %v156 = vld [vmem:[#allocation6 + $0x30] sm:$0xf]
    %v157 = vld [vmem:[#allocation6 + $0x34] sm:$0xf]
    %v158 = vld [vmem:[#allocation6 + $0x38] sm:$0xf]
    %v159 = vld [vmem:[#allocation6 + $0x3c] sm:$0xf]
    %v160 = vld [vmem:[#allocation6 + $0x40] sm:$0xf]
    %v161 = vld [vmem:[#allocation6 + $0x44] sm:$0xf]
    %v162 = vld [vmem:[#allocation6 + $0x48] sm:$0xf]
    %v163 = vld [vmem:[#allocation6 + $0x4c] sm:$0xf]
    %v164 = vld [vmem:[#allocation6 + $0x50] sm:$0xf]
    %v165 = vld [vmem:[#allocation6 + $0x54] sm:$0xf]
    %v166 = vld [vmem:[#allocation6 + $0x58] sm:$0xf]
    %v167 = vld [vmem:[#allocation6 + $0x5c] sm:$0xf]
    %v192 = vunpack.c.l.b16 %v144
    %v193 = vunpack.c.l.b16 %v145
    %v194 = vunpack.c.l.b16 %v146
    %v195 = vunpack.c.l.b16 %v147
    %v196 = vunpack.c.l.b16 %v148
    %v197 = vunpack.c.l.b16 %v149
    %v198 = vunpack.c.l.b16 %v150
    %v199 = vunpack.c.l.b16 %v151
    %v200 = vunpack.c.l.b16 %v152
    %v201 = vunpack.c.l.b16 %v153
    %v202 = vunpack.c.l.b16 %v154
    %v203 = vunpack.c.l.b16 %v155
    %v204 = vunpack.c.l.b16 %v156
    %v205 = vunpack.c.l.b16 %v157
    %v206 = vunpack.c.l.b16 %v158
    %v207 = vunpack.c.l.b16 %v159
    %v208 = vunpack.c.l.b16 %v160
    %v209 = vunpack.c.l.b16 %v161
    %v210 = vunpack.c.l.b16 %v162
    %v211 = vunpack.c.l.b16 %v163
    %v212 = vunpack.c.l.b16 %v164
    %v213 = vunpack.c.l.b16 %v165
    %v214 = vunpack.c.l.b16 %v166
    %v215 = vunpack.c.l.b16 %v167
    %v216 = vpack.c.b16 %v193, %v192
    %v217 = vpack.c.b16 %v195, %v194
    %v218 = vpack.c.b16 %v197, %v196
    %v219 = vpack.c.b16 %v199, %v198
    %v220 = vpack.c.b16 %v201, %v200
    %v221 = vpack.c.b16 %v203, %v202
    %v222 = vpack.c.b16 %v205, %v204
    %v223 = vpack.c.b16 %v207, %v206
    %v224 = vpack.c.b16 %v209, %v208
    %v225 = vpack.c.b16 %v211, %v210
    %v226 = vpack.c.b16 %v213, %v212
    %v227 = vpack.c.b16 %v215, %v214
    %v241 = vsel %vm131, %v119, 0
    %v244 = vsel %vm131, %v120, 0
    %v247 = vsel %vm131, %v121, 0
    %249 = vmatprep.subr.bf16.mxu0 0
    %250 = vmatpush1.bf16.msra.mxu0 %v216
    %251 = vmatprep.subr.bf16.mxu0 0
    %252 = vmatpush1.bf16.msra.mxu0 %v217
    %253 = vmatprep.subr.bf16.mxu0 0
    %254 = vmatpush1.bf16.msra.mxu0 %v218
    %255 = vmatprep.subr.bf16.mxu0 0
    %256 = vmatpush1.bf16.msra.mxu0 %v219
    %257 = vmatprep.subr.bf16.mxu0 0
    %258 = vmatpush1.bf16.msra.mxu0 %v220
    %259 = vmatprep.subr.bf16.mxu0 0
    %260 = vmatpush1.bf16.msra.mxu0 %v221
    %261 = vmatprep.subr.bf16.mxu0 0
    %262 = vmatpush1.bf16.msra.mxu0 %v222
    %263 = vmatprep.subr.bf16.mxu0 0
    %264 = vmatpush1.bf16.msra.mxu0 %v223
    %265 = vmatprep.subr.bf16.mxu0 0
    %266 = vmatpush1.bf16.msra.mxu0 %v224
    %267 = vmatprep.subr.bf16.mxu0 0
    %268 = vmatpush1.bf16.msra.mxu0 %v225
    %269 = vmatprep.subr.bf16.mxu0 0
    %270 = vmatpush1.bf16.msra.mxu0 %v226
    %271 = vmatprep.subr.bf16.mxu0 0
    %272 = vmatpush1.bf16.msra.mxu0 %v227
    %273 = vmatprep.subr.bf16.mxu0 0
    %274 = vmatpush1.bf16.msra.mxu0 0
    %275 = vmatprep.subr.bf16.mxu0 0
    %276 = vmatpush1.bf16.msra.mxu0 0
    %277 = vmatprep.subr.bf16.mxu0 0
    %278 = vmatpush1.bf16.msra.mxu0 0
    %279 = vmatprep.subr.bf16.mxu0 0
    %280 = vmatpush1.bf16.msra.mxu0 0
    %281 = vmatprep.mubr.bf16.mxu0 %v241
    %282 = vmatmul.mubr.bf16.gmra.mrb[0].mxu0 %v134
    %v283 = vpop.f32.mrb[0].mxu0
    %v284 = vadd.f32 0.0, %v283
    %v285 = vpop.f32.mrb[0].mxu0
    %v286 = vpop.f32.mrb[0].mxu0
    %v287 = vadd.f32 0.0, %v286
    %v288 = vpop.f32.mrb[0].mxu0
    %289 = vmatprep.mubr.bf16.mxu0 %v244
    %290 = vmatmul.mubr.bf16.gmra.mrb[0].mxu0 %v138
    %v291 = vpop.f32.mrb[0].mxu0
    %v292 = vadd.f32 0.0, %v291
    %v293 = vpop.f32.mrb[0].mxu0
    %v294 = vpop.f32.mrb[0].mxu0
    %v295 = vadd.f32 0.0, %v294
    %v296 = vpop.f32.mrb[0].mxu0
    %297 = vmatprep.mubr.bf16.mxu0 %v247
    %298 = vmatmul.mubr.bf16.gmra.mrb[0].mxu0 %v142
    %v299 = vpop.f32.mrb[0].mxu0
    %v300 = vadd.f32 0.0, %v299
    %v301 = vpop.f32.mrb[0].mxu0
    %v302 = vpop.f32.mrb[0].mxu0
    %v303 = vadd.f32 0.0, %v302
    %v304 = vpop.f32.mrb[0].mxu0
    %305 = vdwg.mxu0
    %307 = vset.pattern.permute.xlu0 0
    %308 = vperm.xlu0 %307, %v89
    %v309 = vpop.permute.xlu0 %308
    %312 = vset.pattern.permute.xlu0 0
    %313 = vperm.xlu0 %312, %v90
    %v314 = vpop.permute.xlu0 %313
    %317 = vset.pattern.permute.xlu0 0
    %318 = vperm.xlu0 %317, %v91
    %v319 = vpop.permute.xlu0 %318
    %322 = vset.pattern.permute.xlu0 0
    %323 = vperm.xlu0 %322, %v92
    %v324 = vpop.permute.xlu0 %323
    %327 = vset.pattern.permute.xlu0 0
    %328 = vperm.xlu0 %327, %v93
    %v329 = vpop.permute.xlu0 %328
    %332 = vset.pattern.permute.xlu0 0
    %333 = vperm.xlu0 %332, %v94
    %v334 = vpop.permute.xlu0 %333
    %v336 = vmul.f32 %v284, %v309
    %v337 = vmul.f32 %v287, %v314
    %v338 = vmul.f32 %v292, %v319
    %v339 = vmul.f32 %v295, %v324
    %v340 = vmul.f32 %v300, %v329
    %v341 = vmul.f32 %v303, %v334
    %v342 = vadd.f32 %v336, %v337
    %v343 = vadd.f32 %v342, %v338
    %v344 = vadd.f32 %v343, %v339
    %v345 = vadd.f32 %v344, %v340
    %v346 = vadd.f32 %v345, %v341
    %v347 = vrot.slane %v346, 4
    %v348 = vadd.f32 %v346, %v347
    %v349 = vrot.slane %v348, 2
    %v350 = vadd.f32 %v348, %v349
    %v351 = vrot.slane %v350, 1
    %v352 = vadd.f32 %v350, %v351
    %353 = vrot.lane.b32.xlu0 %v352, 8
    %v354 = vpop.permute.xlu0 %353
    %v355 = vadd.f32 %v352, %v354
    %356 = vrot.lane.b32.xlu0 %v355, 16
    %v357 = vpop.permute.xlu0 %356
    %v358 = vadd.f32 %v355, %v357
    %359 = vrot.lane.b32.xlu0 %v358, 32
    %v360 = vpop.permute.xlu0 %359
    %v361 = vadd.f32 %v358, %v360
    %362 = vrot.lane.b32.xlu0 %v361, 64
    %v363 = vpop.permute.xlu0 %362
    %v364 = vadd.f32 %v361, %v363
    %v365 = vmul.f32 %v364, 0.001953125
    %v366 = vlaneseq
    %v367 = vshrl.u32 %v366, 7
    %v368 = vsub.s32 0, %v367
    %v369 = vrot.slane %v365, %v368
    %v370 = vsub.f32 %v284, %v369
    %v371 = vsub.f32 %v287, %v369
    %v372 = vsub.f32 %v292, %v369
    %v373 = vsub.f32 %v295, %v369
    %v374 = vsub.f32 %v300, %v369
    %v375 = vsub.f32 %v303, %v369
    %v376 = vmul.f32 %v370, %v309
    %v377 = vmul.f32 %v371, %v314
    %v378 = vmul.f32 %v372, %v319
    %v379 = vmul.f32 %v373, %v324
    %v380 = vmul.f32 %v374, %v329
    %v381 = vmul.f32 %v375, %v334
    %v382 = vmul.f32 %v376, %v376
    %v383 = vmul.f32 %v377, %v377
    %v384 = vmul.f32 %v378, %v378
    %v385 = vmul.f32 %v379, %v379
    %v386 = vmul.f32 %v380, %v380
    %v387 = vmul.f32 %v381, %v381
    %v388 = vadd.f32 %v382, %v383
    %v389 = vadd.f32 %v388, %v384
    %v390 = vadd.f32 %v389, %v385
    %v391 = vadd.f32 %v390, %v386
    %v392 = vadd.f32 %v391, %v387
    %v393 = vrot.slane %v392, 4
    %v394 = vadd.f32 %v392, %v393
    %v395 = vrot.slane %v394, 2
    %v396 = vadd.f32 %v394, %v395
    %v397 = vrot.slane %v396, 1
    %v398 = vadd.f32 %v396, %v397
    %399 = vrot.lane.b32.xlu0 %v398, 8
    %v400 = vpop.permute.xlu0 %399
    %v401 = vadd.f32 %v398, %v400
    %402 = vrot.lane.b32.xlu0 %v401, 16
    %v403 = vpop.permute.xlu0 %402
    %v404 = vadd.f32 %v401, %v403
    %405 = vrot.lane.b32.xlu0 %v404, 32
    %v406 = vpop.permute.xlu0 %405
    %v407 = vadd.f32 %v404, %v406
    %408 = vrot.lane.b32.xlu0 %v407, 64
    %v409 = vpop.permute.xlu0 %408
    %v410 = vadd.f32 %v407, %v409
    %v411 = vmul.f32 %v410, 0.001953125
    %v412 = vld [vmem:[%s4] sm:$0x1]
    %v413 = vadd.f32 %v411, 1e-05
    %v414 = vrsqrt.pop %v413
    %v415 = vmul.f32 %v412, %v414
    %v417 = vlaneseq
    %v418 = vshrl.u32 %v417, 7
    %v419 = vsub.s32 0, %v418
    %v420 = vrot.slane %v415, %v419
    %v422 = vmul.f32 %v370, %v420
    %v423 = vmul.f32 %v371, %v420
    %v424 = vmul.f32 %v372, %v420
    %v425 = vmul.f32 %v373, %v420
    %v426 = vmul.f32 %v374, %v420
    %v427 = vmul.f32 %v375, %v420
    %v428 = vld [vmem:[%s5] sm:$0x1]
    %v430 = vlaneseq
    %v431 = vshrl.u32 %v430, 7
    %v432 = vsub.s32 0, %v431
    %v433 = vrot.slane %v428, %v432
    %v435 = vadd.f32 %v422, %v433
    %v436 = vadd.f32 %v423, %v433
    %v437 = vadd.f32 %v424, %v433
    %v438 = vadd.f32 %v425, %v433
    %v439 = vadd.f32 %v426, %v433
    %v440 = vadd.f32 %v427, %v433
    %v441 = vmax.f32 %v435, 0.0
    %v442 = vmax.f32 %v436, 0.0
    %v443 = vmax.f32 %v437, 0.0
    %v444 = vmax.f32 %v438, 0.0
    %v445 = vmax.f32 %v439, 0.0
    %v446 = vmax.f32 %v440, 0.0
    %v447 = vmul.f32 %v441, %v309
    %v448 = vmul.f32 %v442, %v314
    %v449 = vmul.f32 %v443, %v319
    %v450 = vmul.f32 %v444, %v324
    %v451 = vmul.f32 %v445, %v329
    %v452 = vmul.f32 %v446, %v334
    %453 = vst [vmem:[#allocation2 + $0x7] sm:$0x1] 0.0
    %454 = vst [vmem:[#allocation2 + $0x38] sm:$0x1] 0.0
    %455 = vst [vmem:[#allocation2 + $0x8] sm:$0xff] %v447
    %456 = vst [vmem:[#allocation2 + $0x10] sm:$0xff] %v448
    %457 = vst [vmem:[#allocation2 + $0x18] sm:$0xff] %v449
    %458 = vst [vmem:[#allocation2 + $0x20] sm:$0xff] %v450
    %459 = vst [vmem:[#allocation2 + $0x28] sm:$0xff] %v451
    %460 = vst [vmem:[#allocation2 + $0x30] sm:$0xff] %v452
    %v461 = vld [vmem:[#allocation2 + $0x7] sm:$0xff]
    %v462 = vld [vmem:[#allocation2 + $0xf] sm:$0xff]
    %v463 = vld [vmem:[#allocation2 + $0x17] sm:$0xff]
    %v464 = vld [vmem:[#allocation2 + $0x1f] sm:$0xff]
    %v465 = vld [vmem:[#allocation2 + $0x27] sm:$0xff]
    %v466 = vld [vmem:[#allocation2 + $0x2f] sm:$0xff]
    %v467 = vpack.c.bf16 %v462, %v461
    %v468 = vpack.c.bf16 %v464, %v463
    %v469 = vpack.c.bf16 %v466, %v465
    %v470 = vld [vmem:[#allocation2 + $0x8] sm:$0xff]
    %v471 = vld [vmem:[#allocation2 + $0x10] sm:$0xff]
    %v472 = vld [vmem:[#allocation2 + $0x18] sm:$0xff]
    %v473 = vld [vmem:[#allocation2 + $0x20] sm:$0xff]
    %v474 = vld [vmem:[#allocation2 + $0x28] sm:$0xff]
    %v475 = vld [vmem:[#allocation2 + $0x30] sm:$0xff]
    %v476 = vpack.c.bf16 %v471, %v470
    %v477 = vpack.c.bf16 %v473, %v472
    %v478 = vpack.c.bf16 %v475, %v474
    %v479 = vld [vmem:[#allocation2 + $0x9] sm:$0xff]
    %v480 = vld [vmem:[#allocation2 + $0x11] sm:$0xff]
    %v481 = vld [vmem:[#allocation2 + $0x19] sm:$0xff]
    %v482 = vld [vmem:[#allocation2 + $0x21] sm:$0xff]
    %v483 = vld [vmem:[#allocation2 + $0x29] sm:$0xff]
    %v484 = vld [vmem:[#allocation2 + $0x31] sm:$0xff]
    %v485 = vpack.c.bf16 %v480, %v479
    %v486 = vpack.c.bf16 %v482, %v481
    %v487 = vpack.c.bf16 %v484, %v483
    %v488 = vld [vmem:[#allocation8] sm:$0xf]
    %v489 = vld [vmem:[#allocation8 + $0x4] sm:$0xf]
    %v490 = vld [vmem:[#allocation8 + $0x8] sm:$0xf]
    %v491 = vld [vmem:[#allocation8 + $0xc] sm:$0xf]
    %v492 = vld [vmem:[#allocation8 + $0x10] sm:$0xf]
    %v493 = vld [vmem:[#allocation8 + $0x14] sm:$0xf]
    %v494 = vld [vmem:[#allocation8 + $0x18] sm:$0xf]
    %v495 = vld [vmem:[#allocation8 + $0x1c] sm:$0xf]
    %v496 = vld [vmem:[#allocation8 + $0x20] sm:$0xf]
    %v497 = vld [vmem:[#allocation8 + $0x24] sm:$0xf]
    %v498 = vld [vmem:[#allocation8 + $0x28] sm:$0xf]
    %v499 = vld [vmem:[#allocation8 + $0x2c] sm:$0xf]
    %v500 = vld [vmem:[#allocation8 + $0x30] sm:$0xf]
    %v501 = vld [vmem:[#allocation8 + $0x34] sm:$0xf]
    %v502 = vld [vmem:[#allocation8 + $0x38] sm:$0xf]
    %v503 = vld [vmem:[#allocation8 + $0x3c] sm:$0xf]
    %v504 = vld [vmem:[#allocation8 + $0x40] sm:$0xf]
    %v505 = vld [vmem:[#allocation8 + $0x44] sm:$0xf]
    %v506 = vld [vmem:[#allocation8 + $0x48] sm:$0xf]
    %v507 = vld [vmem:[#allocation8 + $0x4c] sm:$0xf]
    %v508 = vld [vmem:[#allocation8 + $0x50] sm:$0xf]
    %v509 = vld [vmem:[#allocation8 + $0x54] sm:$0xf]
    %v510 = vld [vmem:[#allocation8 + $0x58] sm:$0xf]
    %v511 = vld [vmem:[#allocation8 + $0x5c] sm:$0xf]
    %v512 = vld [vmem:[#allocation8 + $0x60] sm:$0xf]
    %v513 = vld [vmem:[#allocation8 + $0x64] sm:$0xf]
    %v514 = vld [vmem:[#allocation8 + $0x68] sm:$0xf]
    %v515 = vld [vmem:[#allocation8 + $0x6c] sm:$0xf]
    %v516 = vld [vmem:[#allocation8 + $0x70] sm:$0xf]
    %v517 = vld [vmem:[#allocation8 + $0x74] sm:$0xf]
    %v518 = vld [vmem:[#allocation8 + $0x78] sm:$0xf]
    %v519 = vld [vmem:[#allocation8 + $0x7c] sm:$0xf]
    %v520 = vld [vmem:[#allocation8 + $0x80] sm:$0xf]
    %v521 = vld [vmem:[#allocation8 + $0x84] sm:$0xf]
    %v522 = vld [vmem:[#allocation8 + $0x88] sm:$0xf]
    %v523 = vld [vmem:[#allocation8 + $0x8c] sm:$0xf]
    %v524 = vld [vmem:[#allocation8 + $0x90] sm:$0xf]
    %v525 = vld [vmem:[#allocation8 + $0x94] sm:$0xf]
    %v526 = vld [vmem:[#allocation8 + $0x98] sm:$0xf]
    %v527 = vld [vmem:[#allocation8 + $0x9c] sm:$0xf]
    %v528 = vld [vmem:[#allocation8 + $0xa0] sm:$0xf]
    %v529 = vld [vmem:[#allocation8 + $0xa4] sm:$0xf]
    %v530 = vld [vmem:[#allocation8 + $0xa8] sm:$0xf]
    %v531 = vld [vmem:[#allocation8 + $0xac] sm:$0xf]
    %v532 = vld [vmem:[#allocation8 + $0xb0] sm:$0xf]
    %v533 = vld [vmem:[#allocation8 + $0xb4] sm:$0xf]
    %v534 = vld [vmem:[#allocation8 + $0xb8] sm:$0xf]
    %v535 = vld [vmem:[#allocation8 + $0xbc] sm:$0xf]
    %v584 = vunpack.c.l.b16 %v488
    %v585 = vunpack.c.l.b16 %v489
    %v586 = vunpack.c.l.b16 %v490
    %v587 = vunpack.c.l.b16 %v491
    %v588 = vunpack.c.l.b16 %v492
    %v589 = vunpack.c.l.b16 %v493
    %v590 = vunpack.c.l.b16 %v494
    %v591 = vunpack.c.l.b16 %v495
    %v592 = vunpack.c.l.b16 %v496
    %v593 = vunpack.c.l.b16 %v497
    %v594 = vunpack.c.l.b16 %v498
    %v595 = vunpack.c.l.b16 %v499
    %v596 = vunpack.c.l.b16 %v500
    %v597 = vunpack.c.l.b16 %v501
    %v598 = vunpack.c.l.b16 %v502
    %v599 = vunpack.c.l.b16 %v503
    %v600 = vunpack.c.l.b16 %v504
    %v601 = vunpack.c.l.b16 %v505
    %v602 = vunpack.c.l.b16 %v506
    %v603 = vunpack.c.l.b16 %v507
    %v604 = vunpack.c.l.b16 %v508
    %v605 = vunpack.c.l.b16 %v509
    %v606 = vunpack.c.l.b16 %v510
    %v607 = vunpack.c.l.b16 %v511
    %v608 = vunpack.c.l.b16 %v512
    %v609 = vunpack.c.l.b16 %v513
    %v610 = vunpack.c.l.b16 %v514
    %v611 = vunpack.c.l.b16 %v515
    %v612 = vunpack.c.l.b16 %v516
    %v613 = vunpack.c.l.b16 %v517
    %v614 = vunpack.c.l.b16 %v518
    %v615 = vunpack.c.l.b16 %v519
    %v616 = vunpack.c.l.b16 %v520
    %v617 = vunpack.c.l.b16 %v521
    %v618 = vunpack.c.l.b16 %v522
    %v619 = vunpack.c.l.b16 %v523
    %v620 = vunpack.c.l.b16 %v524
    %v621 = vunpack.c.l.b16 %v525
    %v622 = vunpack.c.l.b16 %v526
    %v623 = vunpack.c.l.b16 %v527
    %v624 = vunpack.c.l.b16 %v528
    %v625 = vunpack.c.l.b16 %v529
    %v626 = vunpack.c.l.b16 %v530
    %v627 = vunpack.c.l.b16 %v531
    %v628 = vunpack.c.l.b16 %v532
    %v629 = vunpack.c.l.b16 %v533
    %v630 = vunpack.c.l.b16 %v534
    %v631 = vunpack.c.l.b16 %v535
    %v632 = vpack.c.b16 %v585, %v584
    %v633 = vpack.c.b16 %v587, %v586
    %v634 = vpack.c.b16 %v589, %v588
    %v635 = vpack.c.b16 %v591, %v590
    %v636 = vpack.c.b16 %v593, %v592
    %v637 = vpack.c.b16 %v595, %v594
    %v638 = vpack.c.b16 %v597, %v596
    %v639 = vpack.c.b16 %v599, %v598
    %v640 = vpack.c.b16 %v601, %v600
    %v641 = vpack.c.b16 %v603, %v602
    %v642 = vpack.c.b16 %v605, %v604
    %v643 = vpack.c.b16 %v607, %v606
    %v644 = vpack.c.b16 %v609, %v608
    %v645 = vpack.c.b16 %v611, %v610
    %v646 = vpack.c.b16 %v613, %v612
    %v647 = vpack.c.b16 %v615, %v614
    %v648 = vpack.c.b16 %v617, %v616
    %v649 = vpack.c.b16 %v619, %v618
    %v650 = vpack.c.b16 %v621, %v620
    %v651 = vpack.c.b16 %v623, %v622
    %v652 = vpack.c.b16 %v625, %v624
    %v653 = vpack.c.b16 %v627, %v626
    %v654 = vpack.c.b16 %v629, %v628
    %v655 = vpack.c.b16 %v631, %v630
    %680 = vmatprep.subr.bf16.mxu0 0
    %681 = vmatpush1.bf16.msra.mxu0 %v632
    %682 = vmatprep.subr.bf16.mxu0 0
    %683 = vmatpush1.bf16.msra.mxu0 %v633
    %684 = vmatprep.subr.bf16.mxu0 0
    %685 = vmatpush1.bf16.msra.mxu0 %v634
    %686 = vmatprep.subr.bf16.mxu0 0
    %687 = vmatpush1.bf16.msra.mxu0 %v635
    %688 = vmatprep.subr.bf16.mxu0 0
    %689 = vmatpush1.bf16.msra.mxu0 %v636
    %690 = vmatprep.subr.bf16.mxu0 0
    %691 = vmatpush1.bf16.msra.mxu0 %v637
    %692 = vmatprep.subr.bf16.mxu0 0
    %693 = vmatpush1.bf16.msra.mxu0 %v638
    %694 = vmatprep.subr.bf16.mxu0 0
    %695 = vmatpush1.bf16.msra.mxu0 %v639
    %696 = vmatprep.subr.bf16.mxu0 0
    %697 = vmatpush1.bf16.msra.mxu0 %v640
    %698 = vmatprep.subr.bf16.mxu0 0
    %699 = vmatpush1.bf16.msra.mxu0 %v641
    %700 = vmatprep.subr.bf16.mxu0 0
    %701 = vmatpush1.bf16.msra.mxu0 %v642
    %702 = vmatprep.subr.bf16.mxu0 0
    %703 = vmatpush1.bf16.msra.mxu0 %v643
    %704 = vmatprep.subr.bf16.mxu0 0
    %705 = vmatpush1.bf16.msra.mxu0 %v644
    %706 = vmatprep.subr.bf16.mxu0 0
    %707 = vmatpush1.bf16.msra.mxu0 %v645
    %708 = vmatprep.subr.bf16.mxu0 0
    %709 = vmatpush1.bf16.msra.mxu0 %v646
    %710 = vmatprep.subr.bf16.mxu0 0
    %711 = vmatpush1.bf16.msra.mxu0 %v647
    %712 = vmatprep.mubr.bf16.mxu0 %v476
    %713 = vmatmul.mubr.bf16.gmra.mrb[0].mxu0 %v467
    %v714 = vpop.f32.mrb[0].mxu0
    %v715 = vadd.f32 0.0, %v714
    %v716 = vpop.f32.mrb[0].mxu0
    %v717 = vpop.f32.mrb[0].mxu0
    %v718 = vadd.f32 0.0, %v717
    %v719 = vpop.f32.mrb[0].mxu0
    %720 = vmatprep.mubr.bf16.mxu0 %v477
    %721 = vmatmul.mubr.bf16.gmra.mrb[0].mxu0 %v468
    %v722 = vpop.f32.mrb[0].mxu0
    %v723 = vadd.f32 0.0, %v722
    %v724 = vpop.f32.mrb[0].mxu0
    %v725 = vpop.f32.mrb[0].mxu0
    %v726 = vadd.f32 0.0, %v725
    %v727 = vpop.f32.mrb[0].mxu0
    %728 = vmatprep.mubr.bf16.mxu0 %v478
    %729 = vmatmul.mubr.bf16.gmra.mrb[0].mxu0 %v469
    %v730 = vpop.f32.mrb[0].mxu0
    %v731 = vadd.f32 0.0, %v730
    %v732 = vpop.f32.mrb[0].mxu0
    %v733 = vpop.f32.mrb[0].mxu0
    %v734 = vadd.f32 0.0, %v733
    %v735 = vpop.f32.mrb[0].mxu0
    %736 = vdwg.mxu0
    %737 = vmatprep.subr.bf16.mxu0 0
    %738 = vmatpush1.bf16.msra.mxu0 %v648
    %739 = vmatprep.subr.bf16.mxu0 0
    %740 = vmatpush1.bf16.msra.mxu0 %v649
    %741 = vmatprep.subr.bf16.mxu0 0
    %742 = vmatpush1.bf16.msra.mxu0 %v650
    %743 = vmatprep.subr.bf16.mxu0 0
    %744 = vmatpush1.bf16.msra.mxu0 %v651
    %745 = vmatprep.subr.bf16.mxu0 0
    %746 = vmatpush1.bf16.msra.mxu0 %v652
    %747 = vmatprep.subr.bf16.mxu0 0
    %748 = vmatpush1.bf16.msra.mxu0 %v653
    %749 = vmatprep.subr.bf16.mxu0 0
    %750 = vmatpush1.bf16.msra.mxu0 %v654
    %751 = vmatprep.subr.bf16.mxu0 0
    %752 = vmatpush1.bf16.msra.mxu0 %v655
    %753 = vmatprep.subr.bf16.mxu0 0
    %754 = vmatpush1.bf16.msra.mxu0 0
    %755 = vmatprep.subr.bf16.mxu0 0
    %756 = vmatpush1.bf16.msra.mxu0 0
    %757 = vmatprep.subr.bf16.mxu0 0
    %758 = vmatpush1.bf16.msra.mxu0 0
    %759 = vmatprep.subr.bf16.mxu0 0
    %760 = vmatpush1.bf16.msra.mxu0 0
    %761 = vmatprep.subr.bf16.mxu0 0
    %762 = vmatpush1.bf16.msra.mxu0 0
    %763 = vmatprep.subr.bf16.mxu0 0
    %764 = vmatpush1.bf16.msra.mxu0 0
    %765 = vmatprep.subr.bf16.mxu0 0
    %766 = vmatpush1.bf16.msra.mxu0 0
    %767 = vmatprep.subr.bf16.mxu0 0
    %768 = vmatpush1.bf16.msra.mxu0 0
    %769 = vmatprep.mubr.bf16.mxu0 0
    %770 = vmatmul.mubr.bf16.gmra.mrb[0].mxu0 %v485
    %v771 = vpop.f32.mrb[0].mxu0
    %v772 = vadd.f32 %v715, %v771
    %v773 = vpop.f32.mrb[0].mxu0
    %v774 = vpop.f32.mrb[0].mxu0
    %v775 = vadd.f32 %v718, %v774
    %v776 = vpop.f32.mrb[0].mxu0
    %777 = vmatprep.mubr.bf16.mxu0 0
    %778 = vmatmul.mubr.bf16.gmra.mrb[0].mxu0 %v486
    %v779 = vpop.f32.mrb[0].mxu0
    %v780 = vadd.f32 %v723, %v779
    %v781 = vpop.f32.mrb[0].mxu0
    %v782 = vpop.f32.mrb[0].mxu0
    %v783 = vadd.f32 %v726, %v782
    %v784 = vpop.f32.mrb[0].mxu0
    %785 = vmatprep.mubr.bf16.mxu0 0
    %786 = vmatmul.mubr.bf16.gmra.mrb[0].mxu0 %v487
    %v787 = vpop.f32.mrb[0].mxu0
    %v788 = vadd.f32 %v731, %v787
    %v789 = vpop.f32.mrb[0].mxu0
    %v790 = vpop.f32.mrb[0].mxu0
    %v791 = vadd.f32 %v734, %v790
    %v792 = vpop.f32.mrb[0].mxu0
    %793 = vdwg.mxu0
    %v794 = vmul.f32 %v772, %v309
    %v795 = vmul.f32 %v775, %v314
    %v796 = vmul.f32 %v780, %v319
    %v797 = vmul.f32 %v783, %v324
    %v798 = vmul.f32 %v788, %v329
    %v799 = vmul.f32 %v791, %v334
    %v800 = vadd.f32 %v794, %v795
    %v801 = vadd.f32 %v800, %v796
    %v802 = vadd.f32 %v801, %v797
    %v803 = vadd.f32 %v802, %v798
    %v804 = vadd.f32 %v803, %v799
    %v805 = vrot.slane %v804, 4
    %v806 = vadd.f32 %v804, %v805
    %v807 = vrot.slane %v806, 2
    %v808 = vadd.f32 %v806, %v807
    %v809 = vrot.slane %v808, 1
    %v810 = vadd.f32 %v808, %v809
    %811 = vrot.lane.b32.xlu0 %v810, 8
    %v812 = vpop.permute.xlu0 %811
    %v813 = vadd.f32 %v810, %v812
    %814 = vrot.lane.b32.xlu0 %v813, 16
    %v815 = vpop.permute.xlu0 %814
    %v816 = vadd.f32 %v813, %v815
    %817 = vrot.lane.b32.xlu0 %v816, 32
    %v818 = vpop.permute.xlu0 %817
    %v819 = vadd.f32 %v816, %v818
    %820 = vrot.lane.b32.xlu0 %v819, 64
    %v821 = vpop.permute.xlu0 %820
    %v822 = vadd.f32 %v819, %v821
    %v823 = vmul.f32 %v822, 0.001953125
    %v824 = vlaneseq
    %v825 = vshrl.u32 %v824, 7
    %v826 = vsub.s32 0, %v825
    %v827 = vrot.slane %v823, %v826
    %v828 = vsub.f32 %v772, %v827
    %v829 = vsub.f32 %v775, %v827
    %v830 = vsub.f32 %v780, %v827
    %v831 = vsub.f32 %v783, %v827
    %v832 = vsub.f32 %v788, %v827
    %v833 = vsub.f32 %v791, %v827
    %v834 = vmul.f32 %v828, %v309
    %v835 = vmul.f32 %v829, %v314
    %v836 = vmul.f32 %v830, %v319
    %v837 = vmul.f32 %v831, %v324
    %v838 = vmul.f32 %v832, %v329
    %v839 = vmul.f32 %v833, %v334
    %v840 = vmul.f32 %v834, %v834
    %v841 = vmul.f32 %v835, %v835
    %v842 = vmul.f32 %v836, %v836
    %v843 = vmul.f32 %v837, %v837
    %v844 = vmul.f32 %v838, %v838
    %v845 = vmul.f32 %v839, %v839
    %v846 = vadd.f32 %v840, %v841
    %v847 = vadd.f32 %v846, %v842
    %v848 = vadd.f32 %v847, %v843
    %v849 = vadd.f32 %v848, %v844
    %v850 = vadd.f32 %v849, %v845
    %v851 = vrot.slane %v850, 4
    %v852 = vadd.f32 %v850, %v851
    %v853 = vrot.slane %v852, 2
    %v854 = vadd.f32 %v852, %v853
    %v855 = vrot.slane %v854, 1
    %v856 = vadd.f32 %v854, %v855
    %857 = vrot.lane.b32.xlu0 %v856, 8
    %v858 = vpop.permute.xlu0 %857
    %v859 = vadd.f32 %v856, %v858
    %860 = vrot.lane.b32.xlu0 %v859, 16
    %v861 = vpop.permute.xlu0 %860
    %v862 = vadd.f32 %v859, %v861
    %863 = vrot.lane.b32.xlu0 %v862, 32
    %v864 = vpop.permute.xlu0 %863
    %v865 = vadd.f32 %v862, %v864
    %866 = vrot.lane.b32.xlu0 %v865, 64
    %v867 = vpop.permute.xlu0 %866
    %v868 = vadd.f32 %v865, %v867
    %v869 = vmul.f32 %v868, 0.001953125
    %v870 = vld [vmem:[%s6] sm:$0x1]
    %v871 = vadd.f32 %v869, 1e-05
    %v872 = vrsqrt.pop %v871
    %v873 = vmul.f32 %v870, %v872
    %v875 = vlaneseq
    %v876 = vshrl.u32 %v875, 7
    %v877 = vsub.s32 0, %v876
    %v878 = vrot.slane %v873, %v877
    %v880 = vmul.f32 %v828, %v878
    %v881 = vmul.f32 %v829, %v878
    %v882 = vmul.f32 %v830, %v878
    %v883 = vmul.f32 %v831, %v878
    %v884 = vmul.f32 %v832, %v878
    %v885 = vmul.f32 %v833, %v878
    %v886 = vld [vmem:[%s7] sm:$0x1]
    %v888 = vlaneseq
    %v889 = vshrl.u32 %v888, 7
    %v890 = vsub.s32 0, %v889
    %v891 = vrot.slane %v886, %v890
    %v893 = vadd.f32 %v880, %v891
    %v894 = vadd.f32 %v881, %v891
    %v895 = vadd.f32 %v882, %v891
    %v896 = vadd.f32 %v883, %v891
    %v897 = vadd.f32 %v884, %v891
    %v898 = vadd.f32 %v885, %v891
    %v899 = vld [vmem:[#allocation3 + $0x8] sm:$0xff]
    %v900 = vld [vmem:[#allocation3 + $0x10] sm:$0xff]
    %v901 = vld [vmem:[#allocation3 + $0x18] sm:$0xff]
    %v902 = vld [vmem:[#allocation3 + $0x20] sm:$0xff]
    %v903 = vld [vmem:[#allocation3 + $0x28] sm:$0xff]
    %v904 = vld [vmem:[#allocation3 + $0x30] sm:$0xff]
    %v905 = vld [vmem:[#allocation9] sm:$0xff]
    %v906 = vld [vmem:[#allocation9 + $0x8] sm:$0xff]
    %v907 = vld [vmem:[#allocation9 + $0x10] sm:$0xff]
    %v908 = vld [vmem:[#allocation9 + $0x18] sm:$0xff]
    %v909 = vld [vmem:[#allocation9 + $0x20] sm:$0xff]
    %v910 = vld [vmem:[#allocation9 + $0x28] sm:$0xff]
    %v911 = vld [vmem:[#allocation9 + $0x30] sm:$0xff]
    %v912 = vld [vmem:[#allocation9 + $0x38] sm:$0xff]
    %v914 = vsel %vm131, %v899, 0
    %v917 = vsel %vm131, %v900, 0
    %v920 = vsel %vm131, %v901, 0
    %v923 = vsel %vm131, %v902, 0
    %v926 = vsel %vm131, %v903, 0
    %v929 = vsel %vm131, %v904, 0
    %931 = vmatprep.subr.mxu0 0.0
    %932 = vmatpush1.msra.mxu0 %v905
    %933 = vmatprep.subr.mxu0 0.0
    %934 = vmatpush1.msra.mxu0 %v906
    %935 = vmatprep.subr.mxu0 0.0
    %936 = vmatpush1.msra.mxu0 %v907
    %937 = vmatprep.subr.mxu0 0.0
    %938 = vmatpush1.msra.mxu0 %v908
    %939 = vmatprep.subr.mxu0 0.0
    %940 = vmatpush1.msra.mxu0 %v909
    %941 = vmatprep.subr.mxu0 0.0
    %942 = vmatpush1.msra.mxu0 %v910
    %943 = vmatprep.subr.mxu0 0.0
    %944 = vmatpush1.msra.mxu0 %v911
    %945 = vmatprep.subr.mxu0 0.0
    %946 = vmatpush1.msra.mxu0 %v912
    %947 = vmatprep.subr.mxu0 0.0
    %948 = vmatpush1.msra.mxu0 0.0
    %949 = vmatprep.subr.mxu0 0.0
    %950 = vmatpush1.msra.mxu0 0.0
    %951 = vmatprep.subr.mxu0 0.0
    %952 = vmatpush1.msra.mxu0 0.0
    %953 = vmatprep.subr.mxu0 0.0
    %954 = vmatpush1.msra.mxu0 0.0
    %955 = vmatprep.subr.mxu0 0.0
    %956 = vmatpush1.msra.mxu0 0.0
    %957 = vmatprep.subr.mxu0 0.0
    %958 = vmatpush1.msra.mxu0 0.0
    %959 = vmatprep.subr.mxu0 0.0
    %960 = vmatpush1.msra.mxu0 0.0
    %961 = vmatprep.subr.mxu0 0.0
    %962 = vmatpush1.msra.mxu0 0.0
    %963 = vmatprep.subr.mxu0 0.0
    %964 = vmatpush1.msra.mxu0 0.0
    %965 = vmatprep.subr.mxu0 0.0
    %966 = vmatpush1.msra.mxu0 0.0
    %967 = vmatprep.subr.mxu0 0.0
    %968 = vmatpush1.msra.mxu0 0.0
    %969 = vmatprep.subr.mxu0 0.0
    %970 = vmatpush1.msra.mxu0 0.0
    %971 = vmatprep.subr.mxu0 0.0
    %972 = vmatpush1.msra.mxu0 0.0
    %973 = vmatprep.subr.mxu0 0.0
    %974 = vmatpush1.msra.mxu0 0.0
    %975 = vmatprep.subr.mxu0 0.0
    %976 = vmatpush1.msra.mxu0 0.0
    %977 = vmatprep.subr.mxu0 0.0
    %978 = vmatpush1.msra.mxu0 0.0
    %979 = vmatprep.subr.mxu0 0.0
    %980 = vmatpush1.msra.mxu0 0.0
    %981 = vmatprep.subr.mxu0 0.0
    %982 = vmatpush1.msra.mxu0 0.0
    %983 = vmatprep.subr.mxu0 0.0
    %984 = vmatpush1.msra.mxu0 0.0
    %985 = vmatprep.subr.mxu0 0.0
    %986 = vmatpush1.msra.mxu0 0.0
    %987 = vmatprep.subr.mxu0 0.0
    %988 = vmatpush1.msra.mxu0 0.0
    %989 = vmatprep.subr.mxu0 0.0
    %990 = vmatpush1.msra.mxu0 0.0
    %991 = vmatprep.subr.mxu0 0.0
    %992 = vmatpush1.msra.mxu0 0.0
    %993 = vmatprep.subr.mxu0 0.0
    %994 = vmatpush1.msra.mxu0 0.0
    %995 = vmatprep.mubr.f32.mxu0 0.0
    %996 = vmatmul.mubr.f32.gmra.mrb[0].mxu0 %v914
    %v997 = vpop.f32.mrb[0].mxu0
    %v998 = vadd.f32 0.0, %v997
    %v999 = vpop.f32.mrb[0].mxu0
    %1000 = vmatprep.mubr.f32.mxu0 0.0
    %1001 = vmatmul.mubr.f32.gmra.mrb[0].mxu0 %v917
    %v1002 = vpop.f32.mrb[0].mxu0
    %v1003 = vadd.f32 0.0, %v1002
    %v1004 = vpop.f32.mrb[0].mxu0
    %1005 = vmatprep.mubr.f32.mxu0 0.0
    %1006 = vmatmul.mubr.f32.gmra.mrb[0].mxu0 %v920
    %v1007 = vpop.f32.mrb[0].mxu0
    %v1008 = vadd.f32 0.0, %v1007
    %v1009 = vpop.f32.mrb[0].mxu0
    %1010 = vmatprep.mubr.f32.mxu0 0.0
    %1011 = vmatmul.mubr.f32.gmra.mrb[0].mxu0 %v923
    %v1012 = vpop.f32.mrb[0].mxu0
    %v1013 = vadd.f32 0.0, %v1012
    %v1014 = vpop.f32.mrb[0].mxu0
    %1015 = vmatprep.mubr.f32.mxu0 0.0
    %1016 = vmatmul.mubr.f32.gmra.mrb[0].mxu0 %v926
    %v1017 = vpop.f32.mrb[0].mxu0
    %v1018 = vadd.f32 0.0, %v1017
    %v1019 = vpop.f32.mrb[0].mxu0
    %1020 = vmatprep.mubr.f32.mxu0 0.0
    %1021 = vmatmul.mubr.f32.gmra.mrb[0].mxu0 %v929
    %v1022 = vpop.f32.mrb[0].mxu0
    %v1023 = vadd.f32 0.0, %v1022
    %v1024 = vpop.f32.mrb[0].mxu0
    %1025 = vdwg.mxu0
    %v1026 = vadd.f32 %v893, %v998
    %v1027 = vadd.f32 %v894, %v1003
    %v1028 = vadd.f32 %v895, %v1008
    %v1029 = vadd.f32 %v896, %v1013
    %v1030 = vadd.f32 %v897, %v1018
    %v1031 = vadd.f32 %v898, %v1023
    %1032 = vst [vmem:[#allocation11] sm:$0xff] %v1026
    %1033 = vst [vmem:[#allocation11 + $0x8] sm:$0xff] %v1027
    %1034 = vst [vmem:[#allocation11 + $0x10] sm:$0xff] %v1028
    %1035 = vst [vmem:[#allocation11 + $0x18] sm:$0xff] %v1029
    %1036 = vst [vmem:[#allocation11 + $0x20] sm:$0xff] %v1030
    %1037 = vst [vmem:[#allocation11 + $0x28] sm:$0xff] %v1031
    // Predicated region
    $region54: #{tpu_custom_call.1} parent=1 // pred_check
      _
    $region55: #{tpu_custom_call.1} parent=1 // pred_check_branch
      %1039 = sbr.rel (0) target = $region57
    $region56: #{tpu_custom_call.1} parent=1 // pred_region
      %s1041 = ssub.s32 768, 768
      %1042 = vsyncadd [#allocation5], %s1041
      %s1043 = sshll.u32 [#allocation11], 4
      %s1044 = int_to_ptr.vmem [resolvable:$true] %s1043
      %1049 = dma.vmem_to_hbm [thread:$0]  %s1044, 768, %s9, [#allocation5], 128, 128, 8
    $region57: #{tpu_custom_call.1} parent=1 // pred_fallthru
      _
    // Predicated region
    $region58: #{tpu_custom_call.1} parent=1 // pred_check
      _
    $region59: #{tpu_custom_call.1} parent=1 // pred_check_branch
      %1051 = sbr.rel (0) target = $region61
    $region60: #{tpu_custom_call.1} parent=1 // pred_region
      %1052 = dma.done [#allocation5], 768
    $region61: #{tpu_custom_call.1} parent=1 // pred_fallthru
      _
    %1053 = vsyncpa [#allocation4], 1
    %1054 = vsyncpa [#allocation7], 1
    %1055 = vsyncpa [#allocation10], 1
    %1056 = vsyncpa [#allocation5], 1

</llo_original>
